<compile_context>
chip_gen: v6e
topology: v6e:2x2x1
jax: 0.10.0
libtpu: 0.0.40
codegen_flags: <defaults>
</compile_context>

<pallas_src>
import functools

import jax
import jax.numpy as jnp
from jax.experimental import pallas as pl
from jax.experimental.pallas import tpu as pltpu

_INF = 1.0e12  # matches the module default inf=1000000000000.0


def _sublane_mult(dtype):
    item = jnp.dtype(dtype).itemsize
    return 8 if item >= 4 else (16 if item == 2 else 32)


def _padded_block_bytes(rows, cols, dtype):
    """VMEM bytes of a (rows, cols) block under Mosaic's (sublane,128) tiling."""
    item = jnp.dtype(dtype).itemsize
    sub = _sublane_mult(dtype)
    r = -(-rows // sub) * sub
    c = -(-cols // 128) * 128
    return r * c * item


def _circle_loss_kernel(logits_ref, labels_ref, out_ref, *,
                        total_rows, block_rows, needs_mask):
    logits = logits_ref[...].astype(jnp.float32)
    labels = labels_ref[...].astype(jnp.float32)

    # (1 - 2*y) * x, then the -inf surrogates for the two masked logsumexps.
    l = (1.0 - 2.0 * labels) * logits
    pos_inf = labels * _INF
    l_neg = l - pos_inf              # positives -> ~-inf
    l_pos = l - (_INF - pos_inf)     # negatives -> ~-inf

    # Row maxes, floored at 0.0 to account for the appended zero column.
    m_neg = jnp.maximum(jnp.max(l_neg, axis=-1, keepdims=True), 0.0)
    m_pos = jnp.maximum(jnp.max(l_pos, axis=-1, keepdims=True), 0.0)

    # One exp per element: shift by the row max of the branch this element
    # actually contributes to (l == l_neg for negatives, l == l_pos for
    # positives), then split the sums with label masks.
    shift = jnp.where(labels > 0.5, m_pos, m_neg)
    e = jnp.exp(l - shift)
    sum_neg = jnp.sum(e * (1.0 - labels), axis=-1, keepdims=True)
    sum_pos = jnp.sum(e * labels, axis=-1, keepdims=True)

    loss = (m_neg + jnp.log(sum_neg + jnp.exp(-m_neg))
            + m_pos + jnp.log(sum_pos + jnp.exp(-m_pos)))      # (tb, 1)

    def _store(row_loss):
        s = jnp.sum(row_loss)
        out_ref[...] = jnp.broadcast_to(s, out_ref.shape).astype(out_ref.dtype)

    if needs_mask:
        # Ragged batch (no wrapper pad): only the last tile contains garbage
        # rows, so only there pay for the iota + compare + select.
        i = pl.program_id(0)
        last = pl.num_programs(0) - 1

        @pl.when(i != last)
        def _():
            _store(loss)

        @pl.when(i == last)
        def _():
            row_ids = i * block_rows + jax.lax.broadcasted_iota(
                jnp.int32, loss.shape, 0)
            _store(jnp.where(row_ids < total_rows, loss, 0.0))
    else:
        _store(loss)


def multilabel_circle_loss(logits, labels, reduction='mean', block_rows=None):
    """Pallas TPU implementation of MultiLabelCircleLoss.forward."""
    assert logits.shape == labels.shape
    assert logits.ndim == 2, "expected (batch, num_labels)"
    B, C = logits.shape

    # Generation-aware budgets (v7x has only 64 MiB VMEM per TensorCore).
    try:
        vmem_capacity = int(pltpu.get_tpu_info().vmem_capacity_bytes)
    except Exception:
        vmem_capacity = 128 << 20
    if vmem_capacity <= (96 << 20):        # v7x-class
        tile_budget = 4 << 20
        vmem_cap = 40 << 20
    else:                                  # v5e / v6e
        tile_budget = 8 << 20
        vmem_cap = 48 << 20

    # (8,128)-tiling-aware per-row footprint (classes rounded to lane multiple).
    lane_cols = -(-C // 128) * 128
    padded_row_bytes = sum(lane_cols * jnp.dtype(d).itemsize
                           for d in (logits.dtype, labels.dtype))
    row_mult = max(_sublane_mult(logits.dtype), _sublane_mult(labels.dtype))

    if block_rows is None:
        tb = max(row_mult, tile_budget // max(padded_row_bytes, 1))
        # Keep grid >= 2 when possible so v7x's two TensorCores both get work.
        if B >= 2 * row_mult:
            half = (-(-((B + 1) // 2) // row_mult)) * row_mult
            tb = min(tb, half)
    else:
        tb = int(block_rows)

    if tb >= B:
        tb = B                              # full-array block: no (8,128) constraint
    else:
        tb = max(row_mult, (tb // row_mult) * row_mult)
        if tb >= B:
            tb = B

    grid = -(-B // tb)
    needs_mask = (grid * tb != B)           # ragged edge handled in-kernel, no jnp.pad

    # Live VMEM: 2 pipeline buffers per input + double-buffered (1,8,128) output.
    live_bytes = (2 * (_padded_block_bytes(tb, C, logits.dtype)
                       + _padded_block_bytes(tb, C, labels.dtype))
                  + 2 * 8 * 128 * 4)
    vmem_limit = int(min(max(int(1.5 * live_bytes), 16 << 20), vmem_cap))
    vmem_limit = max(vmem_limit, live_bytes + (4 << 20))

    kernel = functools.partial(_circle_loss_kernel, total_rows=B,
                               block_rows=tb, needs_mask=needs_mask)

    partials = pl.pallas_call(
        kernel,
        out_shape=jax.ShapeDtypeStruct((grid, 8, 128), jnp.float32),
        grid_spec=pltpu.PrefetchScalarGridSpec(
            num_scalar_prefetch=0,
            grid=(grid,),
            in_specs=[
                pl.BlockSpec((tb, C), lambda i: (i, 0)),
                pl.BlockSpec((tb, C), lambda i: (i, 0)),
            ],
            out_specs=pl.BlockSpec((1, 8, 128), lambda i: (i, 0, 0)),
        ),
        compiler_params=pltpu.CompilerParams(
            dimension_semantics=("parallel",),   # no carry -> shardable (2x on v7x)
            vmem_limit_bytes=vmem_limit),
    )(logits, labels)

    total = jnp.sum(partials[:, 0, 0])
    if reduction == 'mean':
        return total / jnp.float32(B)
    return total


def _reference(logits, labels, reduction='mean', inf=_INF):
    """Pure-JAX reference mirroring the PyTorch forward exactly."""
    labels = labels.astype(jnp.float32)
    logits = logits.astype(jnp.float32)
    logits = (1 - 2 * labels) * logits
    logits_neg = logits - labels * inf
    logits_pos = logits - (1 - labels) * inf
    zeros = jnp.zeros_like(logits[..., :1])
    logits_neg = jnp.concatenate([logits_neg, zeros], axis=-1)
    logits_pos = jnp.concatenate([logits_pos, zeros], axis=-1)
    neg_loss = jax.nn.logsumexp(logits_neg, axis=-1)
    pos_loss = jax.nn.logsumexp(logits_pos, axis=-1)
    loss = neg_loss + pos_loss
    return loss.mean() if reduction == 'mean' else loss.sum()


if __name__ == "__main__":
    key = jax.random.PRNGKey(0)
    k1, k2, k3, k4, k5, k6 = jax.random.split(key, 6)

    # 1) Small (8, 16), f32 labels, 'mean', single full-array block.
    B, C = 8, 16
    logits = jax.random.normal(k1, (B, C), dtype=jnp.float32) * 3.0
    labels = (jax.random.uniform(k2, (B, C)) > 0.5).astype(jnp.float32)
    loss = jax.block_until_ready(multilabel_circle_loss(logits, labels, 'mean'))
    ref = _reference(logits, labels, 'mean')
    assert jnp.allclose(loss, ref, rtol=1e-5, atol=1e-5), (loss, ref)

    # 2) Multi-tile ragged batch, int8 labels (narrow HBM traffic), 'sum',
    #    explicit tile -> 3 grid steps with a ragged last tile (in-kernel mask).
    B2, C2 = 160, 16
    logits2 = jax.random.normal(k3, (B2, C2), dtype=jnp.float32) * 3.0
    labels2 = (jax.random.uniform(k4, (B2, C2)) > 0.5).astype(jnp.int8)
    loss2 = jax.block_until_ready(
        multilabel_circle_loss(logits2, labels2, 'sum', block_rows=64))
    ref2 = _reference(logits2, labels2, 'sum')
    assert jnp.allclose(loss2, ref2, rtol=1e-5, atol=1e-3), (loss2, ref2)

    # 3) bool labels, auto tile sizing, 'mean'.
    B3, C3 = 20, 16
    logits3 = jax.random.normal(k5, (B3, C3), dtype=jnp.float32) * 3.0
    labels3 = jax.random.uniform(k6, (B3, C3)) > 0.5
    loss3 = jax.block_until_ready(multilabel_circle_loss(logits3, labels3, 'mean'))
    ref3 = _reference(logits3, labels3, 'mean')
    assert jnp.allclose(loss3, ref3, rtol=1e-5, atol=1e-5), (loss3, ref3)

    print("KERNEL_OK")
</pallas_src>

<mosaic_0001>
module attributes {stable_mosaic.version = 11 : i64} {
  func.func @_circle_loss_kernel(%arg0: i32, %arg1: memref<8x16xf32, #tpu.memory_space<vmem>>, %arg2: memref<8x16xf32, #tpu.memory_space<vmem>>, %arg3: memref<1x8x128xf32, #tpu.memory_space<vmem>>) attributes {dimension_semantics = [#tpu.dimension_semantics<parallel>], iteration_bounds = array<i64: 1>, scalar_prefetch = 0 : i64, scratch_operands = 0 : i64, tpu.core_type = #tpu.core_type<tc>, window_params = [{transform_indices = @transform_0, window_bounds = array<i64: 8, 16>}, {transform_indices = @transform_1, window_bounds = array<i64: 8, 16>}, {transform_indices = @transform_2, window_bounds = array<i64: 1, 8, 128>}]} {
    %c0 = arith.constant 0 : index
    %c0_0 = arith.constant 0 : index
    %0 = vector.load %arg1[%c0, %c0_0] : memref<8x16xf32, #tpu.memory_space<vmem>>, vector<8x16xf32>
    %c0_1 = arith.constant 0 : index
    %c0_2 = arith.constant 0 : index
    %1 = vector.load %arg2[%c0_1, %c0_2] : memref<8x16xf32, #tpu.memory_space<vmem>>, vector<8x16xf32>
    %cst = arith.constant 2.000000e+00 : f32
    %2 = vector.broadcast %cst : f32 to vector<8x16xf32>
    %3 = arith.mulf %2, %1 : vector<8x16xf32>
    %cst_3 = arith.constant 1.000000e+00 : f32
    %4 = vector.broadcast %cst_3 : f32 to vector<8x16xf32>
    %5 = arith.subf %4, %3 : vector<8x16xf32>
    %6 = arith.mulf %5, %0 : vector<8x16xf32>
    %cst_4 = arith.constant 9.99999995E+11 : f32
    %7 = vector.broadcast %cst_4 : f32 to vector<8x16xf32>
    %8 = arith.mulf %1, %7 : vector<8x16xf32>
    %9 = arith.subf %6, %8 : vector<8x16xf32>
    %cst_5 = arith.constant 9.99999995E+11 : f32
    %10 = vector.broadcast %cst_5 : f32 to vector<8x16xf32>
    %11 = arith.subf %10, %8 : vector<8x16xf32>
    %12 = arith.subf %6, %11 : vector<8x16xf32>
    %cst_6 = arith.constant dense<0xFF800000> : vector<8xf32>
    %13 = vector.multi_reduction <maximumf>, %9, %cst_6 [1] : vector<8x16xf32> to vector<8xf32>
    %14 = vector.shape_cast %13 : vector<8xf32> to vector<8x1xf32>
    %cst_7 = arith.constant 0.000000e+00 : f32
    %15 = vector.broadcast %cst_7 : f32 to vector<8x1xf32>
    %16 = arith.maximumf %14, %15 : vector<8x1xf32>
    %cst_8 = arith.constant dense<0xFF800000> : vector<8xf32>
    %17 = vector.multi_reduction <maximumf>, %12, %cst_8 [1] : vector<8x16xf32> to vector<8xf32>
    %18 = vector.shape_cast %17 : vector<8xf32> to vector<8x1xf32>
    %cst_9 = arith.constant 0.000000e+00 : f32
    %19 = vector.broadcast %cst_9 : f32 to vector<8x1xf32>
    %20 = arith.maximumf %18, %19 : vector<8x1xf32>
    %cst_10 = arith.constant 5.000000e-01 : f32
    %21 = vector.broadcast %cst_10 : f32 to vector<8x16xf32>
    %22 = arith.cmpf ogt, %1, %21 : vector<8x16xf32>
    %23 = vector.shape_cast %20 : vector<8x1xf32> to vector<8x1xf32>
    %24 = vector.broadcast %23 : vector<8x1xf32> to vector<8x16xf32>
    %25 = vector.shape_cast %16 : vector<8x1xf32> to vector<8x1xf32>
    %26 = vector.broadcast %25 : vector<8x1xf32> to vector<8x16xf32>
    %27 = arith.select %22, %24, %26 : vector<8x16xi1>, vector<8x16xf32>
    %28 = arith.subf %6, %27 : vector<8x16xf32>
    %29 = math.exp %28 : vector<8x16xf32>
    %cst_11 = arith.constant 1.000000e+00 : f32
    %30 = vector.broadcast %cst_11 : f32 to vector<8x16xf32>
    %31 = arith.subf %30, %1 : vector<8x16xf32>
    %32 = arith.mulf %29, %31 : vector<8x16xf32>
    %cst_12 = arith.constant dense<0.000000e+00> : vector<8xf32>
    %33 = vector.multi_reduction <add>, %32, %cst_12 [1] : vector<8x16xf32> to vector<8xf32>
    %34 = vector.shape_cast %33 : vector<8xf32> to vector<8x1xf32>
    %35 = arith.mulf %29, %1 : vector<8x16xf32>
    %cst_13 = arith.constant dense<0.000000e+00> : vector<8xf32>
    %36 = vector.multi_reduction <add>, %35, %cst_13 [1] : vector<8x16xf32> to vector<8xf32>
    %37 = vector.shape_cast %36 : vector<8xf32> to vector<8x1xf32>
    %cst_14 = arith.constant 0.000000e+00 : f32
    %38 = vector.broadcast %cst_14 : f32 to vector<8x1xf32>
    %39 = arith.subf %38, %16 : vector<8x1xf32>
    %40 = math.exp %39 : vector<8x1xf32>
    %41 = arith.addf %34, %40 : vector<8x1xf32>
    %42 = math.log %41 : vector<8x1xf32>
    %43 = arith.addf %16, %42 : vector<8x1xf32>
    %44 = arith.addf %43, %20 : vector<8x1xf32>
    %cst_15 = arith.constant 0.000000e+00 : f32
    %45 = vector.broadcast %cst_15 : f32 to vector<8x1xf32>
    %46 = arith.subf %45, %20 : vector<8x1xf32>
    %47 = math.exp %46 : vector<8x1xf32>
    %48 = arith.addf %37, %47 : vector<8x1xf32>
    %49 = math.log %48 : vector<8x1xf32>
    %50 = arith.addf %44, %49 : vector<8x1xf32>
    %51 = vector.shape_cast %50 : vector<8x1xf32> to vector<1x8x1xf32>
    %cst_16 = arith.constant dense<0.000000e+00> : vector<1xf32>
    %52 = vector.multi_reduction <add>, %51, %cst_16 [1, 2] : vector<1x8x1xf32> to vector<1xf32>
    %53 = vector.shape_cast %52 : vector<1xf32> to vector<1x1x1xf32>
    %54 = vector.extract %53[0, 0, 0] : f32 from vector<1x1x1xf32>
    %55 = vector.broadcast %54 : f32 to vector<1x8x128xf32>
    %c0_17 = arith.constant 0 : index
    %c0_18 = arith.constant 0 : index
    %c0_19 = arith.constant 0 : index
    %56 = vector.load %arg3[%c0_17, %c0_18, %c0_19] : memref<1x8x128xf32, #tpu.memory_space<vmem>>, vector<1x8x128xf32>
    tpu.vector_store %arg3[%c0_17, %c0_18, %c0_19], %55 {strides = array<i32>} : memref<1x8x128xf32, #tpu.memory_space<vmem>>, vector<1x8x128xf32>,
    return
  }
  func.func @transform_0(%arg0: i32) -> (i32, i32) {
    %c0_i32 = arith.constant 0 : i32
    %c0_i32_0 = arith.constant 0 : i32
    return %arg0, %c0_i32 : i32, i32
  }
  func.func @transform_1(%arg0: i32) -> (i32, i32) {
    %c0_i32 = arith.constant 0 : i32
    %c0_i32_0 = arith.constant 0 : i32
    return %arg0, %c0_i32 : i32, i32
  }
  func.func @transform_2(%arg0: i32) -> (i32, i32, i32) {
    %c0_i32 = arith.constant 0 : i32
    %c0_i32_0 = arith.constant 0 : i32
    %c0_i32_1 = arith.constant 0 : i32
    return %arg0, %c0_i32, %c0_i32_0 : i32, i32, i32
  }
}

</mosaic_0001>

<llo_original>
// kernel: tpu_custom_call.1
$region0: #{tpu_custom_call.1}
  #allocation0 [shape = 'u32[]', space=smem, size = 0x4, offset = 0x4, fixed_abs, tag = 'smem constant byte address 0x4 - core index']
  #allocation1 [shape = 'u32[144,128]{1,0:T(1,128)}', space=vmem, size = 0x12000, scoped, tag = 'internal scratch']
  %s0 = inlined_call_operand.hbm [shape: f32[8,16], index: 0, kind: input, shape index: {}]
  %s1 = inlined_call_operand.hbm [shape: f32[8,16], index: 1, kind: input, shape index: {}]
  %s2 = inlined_call_operand.hbm [shape: f32[1,8,128], index: 2, kind: output, shape index: {}]
  %s3 = sld [smem:[#allocation0]]
  $region26: #{tpu_custom_call.1} parent=0
    _
  %s5 = ssub.s32 1, %s3
  %s6 = scalar_select 0, %s5, %s3
  $region1: #{tpu_custom_call.1} parent=0
    #allocation2 [shape = 'u8[4096]{0}', space=vmem, size = 0x1000, scoped, tag = 'input window, operand 0, single buffered']
    #allocation3 [shape = 's32[1]{0}', space=sflag, size = 0x4, scoped, tag = 'scoped memory for tpu_custom_call.1']
    #allocation4 [shape = 's32[1]{0}', space=sflag, size = 0x4, scoped, tag = 'scoped memory for tpu_custom_call.1']
    #allocation5 [shape = 'u8[4096]{0}', space=vmem, size = 0x1000, scoped, tag = 'input window, operand 1, single buffered']
    #allocation6 [shape = 's32[1]{0}', space=sflag, size = 0x4, scoped, tag = 'scoped memory for tpu_custom_call.1']
    #allocation7 [shape = 'u8[4096]{0}', space=vmem, size = 0x1000, scoped, tag = 'output window, operand 0, single buffered']
    %7 = vsyncpa [#allocation3], 0
    %8 = vsyncpa [#allocation6], 0
    %9 = vsyncpa [#allocation4], 0
    // Predicated region
    $region2: #{tpu_custom_call.1} parent=1 // pred_check
      _
    $region3: #{tpu_custom_call.1} parent=1 // pred_check_branch
      %11 = sbr.rel (0) target = $region5
    $region4: #{tpu_custom_call.1} parent=1 // pred_region
      %s13 = ssub.s32 128, 128
      %14 = vsyncadd [#allocation3], %s13
      %s16 = sshll.u32 [#allocation2], 4
      %s17 = int_to_ptr.vmem [resolvable:$true] %s16
      %19 = dma.hbm_to_vmem [thread:$0]  %s0, 128, %s17, [#allocation3]
    $region5: #{tpu_custom_call.1} parent=1 // pred_fallthru
      _
    // Predicated region
    $region6: #{tpu_custom_call.1} parent=1 // pred_check
      _
    $region7: #{tpu_custom_call.1} parent=1 // pred_check_branch
      %21 = sbr.rel (0) target = $region9
    $region8: #{tpu_custom_call.1} parent=1 // pred_region
      %s23 = ssub.s32 128, 128
      %24 = vsyncadd [#allocation6], %s23
      %s26 = sshll.u32 [#allocation5], 4
      %s27 = int_to_ptr.vmem [resolvable:$true] %s26
      %29 = dma.hbm_to_vmem [thread:$0]  %s1, 128, %s27, [#allocation6]
    $region9: #{tpu_custom_call.1} parent=1 // pred_fallthru
      _
    // Predicated region
    $region10: #{tpu_custom_call.1} parent=1 // pred_check
      _
    $region11: #{tpu_custom_call.1} parent=1 // pred_check_branch
      %31 = sbr.rel (0) target = $region13
    $region12: #{tpu_custom_call.1} parent=1 // pred_region
      %32 = dma.done [#allocation3], 128
    $region13: #{tpu_custom_call.1} parent=1 // pred_fallthru
      _
    // Predicated region
    $region14: #{tpu_custom_call.1} parent=1 // pred_check
      _
    $region15: #{tpu_custom_call.1} parent=1 // pred_check_branch
      %34 = sbr.rel (0) target = $region17
    $region16: #{tpu_custom_call.1} parent=1 // pred_region
      %35 = dma.done [#allocation6], 128
    $region17: #{tpu_custom_call.1} parent=1 // pred_fallthru
      _
    %v36 = vld [vmem:[#allocation2] sm:$0xff]
    %v37 = vld [vmem:[#allocation5] sm:$0xff]
    %v38 = vmul.f32 %v37, 2.0
    %v39 = vsub.f32 1.0, %v38
    %v40 = vmul.f32 %v39, %v36
    %v41 = vmul.f32 %v37, 1e+12
    %v42 = vsub.f32 %v40, %v41
    %v43 = vsub.f32 1e+12, %v41
    %v44 = vsub.f32 %v40, %v43
    %vm45 = vcmask 130048
    %v46 = vsel %vm45, %v42, -inf
    %47 = vmax.xlane.f32.xlu0 %v46
    %v48 = vpop.xlane.xlu0 %47
    %v49 = vmax.f32 %v48, 0.0
    %v50 = vsel %vm45, %v44, -inf
    %51 = vmax.xlane.f32.xlu0 %v50
    %v52 = vpop.xlane.xlu0 %51
    %v53 = vmax.f32 %v52, 0.0
    %vm54 = vcmp.gt.f32.partialorder %v37, 0.5
    %v55 = vsel %vm54, %v53, %v49
    %v56 = vsub.f32 %v40, %v55
    %v57 = vmul.f32 %v56, 1.442695
    %v58 = vpow.pop %v57
    %v59 = vsub.f32 1.0, %v37
    %v60 = vmul.f32 %v58, %v59
    %v61 = vsel %vm45, %v60, 0.0
    %62 = vadd.xlane.f32.xlu0 %v61
    %v63 = vpop.xlane.xlu0 %62
    %v64 = vmul.f32 %v58, %v37
    %v65 = vsel %vm45, %v64, 0.0
    %66 = vadd.xlane.f32.xlu0 %v65
    %v67 = vpop.xlane.xlu0 %66
    %v68 = vsub.f32 0.0, %v49
    %v69 = vmul.f32 %v68, 1.442695
    %v70 = vpow.pop %v69
    %v71 = vadd.f32 %v63, %v70
    %v72 = vlog2.pop %v71
    %v73 = vmul.f32 %v72, 0.6931472
    %v74 = vadd.f32 %v49, %v73
    %v75 = vadd.f32 %v74, %v53
    %v76 = vsub.f32 0.0, %v53
    %v77 = vmul.f32 %v76, 1.442695
    %v78 = vpow.pop %v77
    %v79 = vadd.f32 %v67, %v78
    %v80 = vlog2.pop %v79
    %v81 = vmul.f32 %v80, 0.6931472
    %v82 = vadd.f32 %v75, %v81
    %vm83 = vcmask 7168
    %v84 = vsel %vm83, %v82, 0.0
    %85 = vadd.xlane.f32.xlu0 %v84
    %v86 = vpop.xlane.xlu0 %85
    %v87 = vrot.slane %v86, 4
    %v88 = vadd.f32 %v86, %v87
    %v89 = vrot.slane %v88, 2
    %v90 = vadd.f32 %v88, %v89
    %v91 = vrot.slane %v90, 1
    %v92 = vadd.f32 %v90, %v91
    %s93 = vtos %v92
    %v94 = vstv %s93
    %95 = vst [vmem:[#allocation7] sm:$0xff] %v94
    // Predicated region
    $region18: #{tpu_custom_call.1} parent=1 // pred_check
      _
    $region19: #{tpu_custom_call.1} parent=1 // pred_check_branch
      %97 = sbr.rel (0) target = $region21
    $region20: #{tpu_custom_call.1} parent=1 // pred_region
      %s99 = ssub.s32 128, 128
      %100 = vsyncadd [#allocation4], %s99
      %s102 = sshll.u32 [#allocation7], 4
      %s103 = int_to_ptr.vmem [resolvable:$true] %s102
      %105 = dma.vmem_to_hbm [thread:$0]  %s103, 128, %s2, [#allocation4]
    $region21: #{tpu_custom_call.1} parent=1 // pred_fallthru
      _
    // Predicated region
    $region22: #{tpu_custom_call.1} parent=1 // pred_check
      _
    $region23: #{tpu_custom_call.1} parent=1 // pred_check_branch
      %107 = sbr.rel (0) target = $region25
    $region24: #{tpu_custom_call.1} parent=1 // pred_region
      %108 = dma.done [#allocation4], 128
    $region25: #{tpu_custom_call.1} parent=1 // pred_fallthru
      _
    %109 = vsyncpa [#allocation3], 1
    %110 = vsyncpa [#allocation6], 1
    %111 = vsyncpa [#allocation4], 1

</llo_original>
